<compile_context>
chip_gen: v5e
topology: v5e:2x2
jax: 0.10.0
libtpu: 0.0.40
codegen_flags: <defaults>
</compile_context>

<pallas_src>
import jax
import jax.numpy as jnp
from jax.experimental import pallas as pl
from jax.experimental.pallas import tpu as pltpu


def _round_up(x, m):
    return (x + m - 1) // m * m


def mlp_c_kernel(x_ref,
                 w1_ref, b1_ref,
                 w2_ref, b2_ref,
                 w3_ref, b3_ref,
                 w4_ref, b4_ref,
                 o_ref):
    # x and weights are bf16 (MXU operands); bias-add / ReLU / accumulation in f32.
    h = jnp.dot(x_ref[...], w1_ref[...],
                preferred_element_type=jnp.float32) + b1_ref[...]
    h = jnp.maximum(h, 0.0)
    h = jnp.dot(h.astype(jnp.bfloat16), w2_ref[...],
                preferred_element_type=jnp.float32) + b2_ref[...]
    h = jnp.maximum(h, 0.0)
    h = jnp.dot(h.astype(jnp.bfloat16), w3_ref[...],
                preferred_element_type=jnp.float32) + b3_ref[...]
    h = jnp.maximum(h, 0.0)
    out = jnp.dot(h.astype(jnp.bfloat16), w4_ref[...],
                  preferred_element_type=jnp.float32) + b4_ref[...]
    o_ref[...] = out.astype(o_ref.dtype)


def mlp_c_forward(x, params, *, block_b=256):
    """x: (B, input_size) float32; params: (w1,b1,...,w4,b4) with W_k as (in, out)."""
    w1, b1, w2, b2, w3, b3, w4, b4 = params
    B, Din = x.shape
    H = w1.shape[1]
    Din3 = w3.shape[1]
    num_classes = w4.shape[1]

    # Lane-dense output: pad the final layer out to a multiple of 128 columns.
    C_pad = _round_up(num_classes, 128)
    if C_pad != num_classes:
        w4 = jnp.pad(w4, ((0, 0), (0, C_pad - num_classes)))
        b4 = jnp.pad(b4, ((0, 0), (0, C_pad - num_classes)))

    # Batch tile: multiple of 16 (bf16 sublane packing), capped at block_b.
    TB = min(_round_up(block_b, 16), _round_up(B, 16))
    B_pad = _round_up(B, TB)
    if B_pad != B:
        x = jnp.pad(x, ((0, B_pad - B), (0, 0)))

    # MXU-native bf16 operands; biases stay f32.
    x_bf = x.astype(jnp.bfloat16)
    w1b, w2b, w3b, w4b = (w.astype(jnp.bfloat16) for w in (w1, w2, w3, w4))
    b1f, b2f, b3f, b4f = (b.astype(jnp.float32) for b in (b1, b2, b3, b4))

    grid = (B_pad // TB,)

    def resident(arr):
        # Whole 2-D array as one VMEM-resident block shared across all batch tiles.
        return pl.BlockSpec(arr.shape, lambda i: (0, 0))

    flops = 2 * B_pad * (Din * H + H * H + H * Din3 + Din3 * C_pad)
    bytes_accessed = (
        x_bf.size * 2
        + sum(w.size * 2 for w in (w1b, w2b, w3b, w4b))
        + sum(b.size * 4 for b in (b1f, b2f, b3f, b4f))
        + B_pad * C_pad * 4
    )

    out_padded = pl.pallas_call(
        mlp_c_kernel,
        out_shape=jax.ShapeDtypeStruct((B_pad, C_pad), jnp.float32),
        grid=grid,
        in_specs=[
            pl.BlockSpec((TB, Din), lambda i: (i, 0)),   # batch-tiled x
            resident(w1b), resident(b1f),
            resident(w2b), resident(b2f),
            resident(w3b), resident(b3f),
            resident(w4b), resident(b4f),
        ],
        out_specs=pl.BlockSpec((TB, C_pad), lambda i: (i, 0)),
        compiler_params=pltpu.CompilerParams(
            dimension_semantics=("parallel",),
            vmem_limit_bytes=64 * 1024 * 1024),
        cost_estimate=pl.CostEstimate(
            flops=flops, transcendentals=0, bytes_accessed=bytes_accessed),
    )(x_bf, w1b, b1f, w2b, b2f, w3b, b3f, w4b, b4f)

    return out_padded[:B, :num_classes]


def init_params(key, input_size, num_classes, dtype=jnp.float32):
    """Deterministic init matching PyTorch nn.Linear shapes (weights kept as (in, out))."""
    dims = [(input_size, 2 * input_size),
            (2 * input_size, 2 * input_size),
            (2 * input_size, input_size),
            (input_size, num_classes)]
    params = []
    for (din, dout) in dims:
        key, kw, kb = jax.random.split(key, 3)
        bound = 1.0 / jnp.sqrt(jnp.array(din, dtype=jnp.float32))
        w = jax.random.uniform(kw, (din, dout), dtype, -bound, bound)
        b = jax.random.uniform(kb, (1, dout), dtype, -bound, bound)
        params += [w, b]
    return tuple(params)


def mlp_c_reference(x, params):
    """Full-f32 reference (PyTorch semantics)."""
    w1, b1, w2, b2, w3, b3, w4, b4 = params
    h = jnp.maximum(x @ w1 + b1, 0.0)
    h = jnp.maximum(h @ w2 + b2, 0.0)
    h = jnp.maximum(h @ w3 + b3, 0.0)
    return h @ w4 + b4


if __name__ == "__main__":
    input_size = 32
    num_classes = 8
    batch = 8

    key = jax.random.PRNGKey(0)
    kx, kp = jax.random.split(key)
    x = jax.random.normal(kx, (batch, input_size), jnp.float32)
    params = init_params(kp, input_size, num_classes)

    out = mlp_c_forward(x, params)
    out = jax.block_until_ready(out)

    ref = mlp_c_reference(x, params)
    assert out.shape == (batch, num_classes), out.shape
    # Matmul operands are bf16 (f32 accumulation), so use a loosened tolerance.
    err = float(jnp.max(jnp.abs(out - ref)))
    assert jnp.allclose(out, ref, atol=5e-2, rtol=5e-2), "max abs err = %g" % err

    print("KERNEL_OK")
</pallas_src>

<mosaic_0001>
module attributes {stable_mosaic.version = 11 : i64} {
  func.func @mlp_c_kernel(%arg0: i32, %arg1: memref<16x32xbf16, #tpu.memory_space<vmem>>, %arg2: memref<32x64xbf16, #tpu.memory_space<vmem>>, %arg3: memref<1x64xf32, #tpu.memory_space<vmem>>, %arg4: memref<64x64xbf16, #tpu.memory_space<vmem>>, %arg5: memref<1x64xf32, #tpu.memory_space<vmem>>, %arg6: memref<64x32xbf16, #tpu.memory_space<vmem>>, %arg7: memref<1x32xf32, #tpu.memory_space<vmem>>, %arg8: memref<32x128xbf16, #tpu.memory_space<vmem>>, %arg9: memref<1x128xf32, #tpu.memory_space<vmem>>, %arg10: memref<16x128xf32, #tpu.memory_space<vmem>>) attributes {dimension_semantics = [#tpu.dimension_semantics<parallel>], iteration_bounds = array<i64: 1>, scalar_prefetch = 0 : i64, scratch_operands = 0 : i64, tpu.core_type = #tpu.core_type<tc>, window_params = [{transform_indices = @transform_0, window_bounds = array<i64: 16, 32>}, {pipeline_mode = #tpu.pipeline_mode<synchronous>, transform_indices = @transform_1, window_bounds = array<i64: 32, 64>}, {pipeline_mode = #tpu.pipeline_mode<synchronous>, transform_indices = @transform_2, window_bounds = array<i64: 1, 64>}, {pipeline_mode = #tpu.pipeline_mode<synchronous>, transform_indices = @transform_3, window_bounds = array<i64: 64, 64>}, {pipeline_mode = #tpu.pipeline_mode<synchronous>, transform_indices = @transform_4, window_bounds = array<i64: 1, 64>}, {pipeline_mode = #tpu.pipeline_mode<synchronous>, transform_indices = @transform_5, window_bounds = array<i64: 64, 32>}, {pipeline_mode = #tpu.pipeline_mode<synchronous>, transform_indices = @transform_6, window_bounds = array<i64: 1, 32>}, {pipeline_mode = #tpu.pipeline_mode<synchronous>, transform_indices = @transform_7, window_bounds = array<i64: 32, 128>}, {pipeline_mode = #tpu.pipeline_mode<synchronous>, transform_indices = @transform_8, window_bounds = array<i64: 1, 128>}, {transform_indices = @transform_9, window_bounds = array<i64: 16, 128>}]} {
    %c0 = arith.constant 0 : index
    %c0_0 = arith.constant 0 : index
    %0 = vector.load %arg1[%c0, %c0_0] : memref<16x32xbf16, #tpu.memory_space<vmem>>, vector<16x32xbf16>
    %c0_1 = arith.constant 0 : index
    %c0_2 = arith.constant 0 : index
    %1 = vector.load %arg2[%c0_1, %c0_2] : memref<32x64xbf16, #tpu.memory_space<vmem>>, vector<32x64xbf16>
    %cst = arith.constant dense<0.000000e+00> : vector<16x64xf32>
    %2 = tpu.matmul %0, %1, %cst {dimension_numbers = #tpu.dot_dimension_numbers<[1], [0], [0], [1], [0, 0, 1, 1], [], []>} : vector<16x32xbf16>, vector<32x64xbf16>, vector<16x64xf32> -> vector<16x64xf32>
    %c0_3 = arith.constant 0 : index
    %c0_4 = arith.constant 0 : index
    %3 = vector.load %arg3[%c0_3, %c0_4] : memref<1x64xf32, #tpu.memory_space<vmem>>, vector<1x64xf32>
    %4 = vector.broadcast %3 : vector<1x64xf32> to vector<16x64xf32>
    %5 = arith.addf %2, %4 : vector<16x64xf32>
    %cst_5 = arith.constant 0.000000e+00 : f32
    %6 = vector.broadcast %cst_5 : f32 to vector<16x64xf32>
    %7 = arith.maximumf %5, %6 : vector<16x64xf32>
    %8 = arith.truncf %7 : vector<16x64xf32> to vector<16x64xbf16>
    %c0_6 = arith.constant 0 : index
    %c0_7 = arith.constant 0 : index
    %9 = vector.load %arg4[%c0_6, %c0_7] : memref<64x64xbf16, #tpu.memory_space<vmem>>, vector<64x64xbf16>
    %cst_8 = arith.constant dense<0.000000e+00> : vector<16x64xf32>
    %10 = tpu.matmul %8, %9, %cst_8 {dimension_numbers = #tpu.dot_dimension_numbers<[1], [0], [0], [1], [0, 0, 1, 1], [], []>} : vector<16x64xbf16>, vector<64x64xbf16>, vector<16x64xf32> -> vector<16x64xf32>
    %c0_9 = arith.constant 0 : index
    %c0_10 = arith.constant 0 : index
    %11 = vector.load %arg5[%c0_9, %c0_10] : memref<1x64xf32, #tpu.memory_space<vmem>>, vector<1x64xf32>
    %12 = vector.broadcast %11 : vector<1x64xf32> to vector<16x64xf32>
    %13 = arith.addf %10, %12 : vector<16x64xf32>
    %cst_11 = arith.constant 0.000000e+00 : f32
    %14 = vector.broadcast %cst_11 : f32 to vector<16x64xf32>
    %15 = arith.maximumf %13, %14 : vector<16x64xf32>
    %16 = arith.truncf %15 : vector<16x64xf32> to vector<16x64xbf16>
    %c0_12 = arith.constant 0 : index
    %c0_13 = arith.constant 0 : index
    %17 = vector.load %arg6[%c0_12, %c0_13] : memref<64x32xbf16, #tpu.memory_space<vmem>>, vector<64x32xbf16>
    %cst_14 = arith.constant dense<0.000000e+00> : vector<16x32xf32>
    %18 = tpu.matmul %16, %17, %cst_14 {dimension_numbers = #tpu.dot_dimension_numbers<[1], [0], [0], [1], [0, 0, 1, 1], [], []>} : vector<16x64xbf16>, vector<64x32xbf16>, vector<16x32xf32> -> vector<16x32xf32>
    %c0_15 = arith.constant 0 : index
    %c0_16 = arith.constant 0 : index
    %19 = vector.load %arg7[%c0_15, %c0_16] : memref<1x32xf32, #tpu.memory_space<vmem>>, vector<1x32xf32>
    %20 = vector.broadcast %19 : vector<1x32xf32> to vector<16x32xf32>
    %21 = arith.addf %18, %20 : vector<16x32xf32>
    %cst_17 = arith.constant 0.000000e+00 : f32
    %22 = vector.broadcast %cst_17 : f32 to vector<16x32xf32>
    %23 = arith.maximumf %21, %22 : vector<16x32xf32>
    %24 = arith.truncf %23 : vector<16x32xf32> to vector<16x32xbf16>
    %c0_18 = arith.constant 0 : index
    %c0_19 = arith.constant 0 : index
    %25 = vector.load %arg8[%c0_18, %c0_19] : memref<32x128xbf16, #tpu.memory_space<vmem>>, vector<32x128xbf16>
    %cst_20 = arith.constant dense<0.000000e+00> : vector<16x128xf32>
    %26 = tpu.matmul %24, %25, %cst_20 {dimension_numbers = #tpu.dot_dimension_numbers<[1], [0], [0], [1], [0, 0, 1, 1], [], []>} : vector<16x32xbf16>, vector<32x128xbf16>, vector<16x128xf32> -> vector<16x128xf32>
    %c0_21 = arith.constant 0 : index
    %c0_22 = arith.constant 0 : index
    %27 = vector.load %arg9[%c0_21, %c0_22] : memref<1x128xf32, #tpu.memory_space<vmem>>, vector<1x128xf32>
    %28 = vector.broadcast %27 : vector<1x128xf32> to vector<16x128xf32>
    %29 = arith.addf %26, %28 : vector<16x128xf32>
    %c0_23 = arith.constant 0 : index
    %c0_24 = arith.constant 0 : index
    %30 = vector.load %arg10[%c0_23, %c0_24] : memref<16x128xf32, #tpu.memory_space<vmem>>, vector<16x128xf32>
    tpu.vector_store %arg10[%c0_23, %c0_24], %29 {strides = array<i32>} : memref<16x128xf32, #tpu.memory_space<vmem>>, vector<16x128xf32>,
    return
  }
  func.func @transform_0(%arg0: i32) -> (i32, i32) {
    %c0_i32 = arith.constant 0 : i32
    %c0_i32_0 = arith.constant 0 : i32
    return %arg0, %c0_i32 : i32, i32
  }
  func.func @transform_1(%arg0: i32) -> (i32, i32) {
    %c0_i32 = arith.constant 0 : i32
    %c0_i32_0 = arith.constant 0 : i32
    %c0_i32_1 = arith.constant 0 : i32
    return %c0_i32, %c0_i32_0 : i32, i32
  }
  func.func @transform_2(%arg0: i32) -> (i32, i32) {
    %c0_i32 = arith.constant 0 : i32
    %c0_i32_0 = arith.constant 0 : i32
    %c0_i32_1 = arith.constant 0 : i32
    return %c0_i32, %c0_i32_0 : i32, i32
  }
  func.func @transform_3(%arg0: i32) -> (i32, i32) {
    %c0_i32 = arith.constant 0 : i32
    %c0_i32_0 = arith.constant 0 : i32
    %c0_i32_1 = arith.constant 0 : i32
    return %c0_i32, %c0_i32_0 : i32, i32
  }
  func.func @transform_4(%arg0: i32) -> (i32, i32) {
    %c0_i32 = arith.constant 0 : i32
    %c0_i32_0 = arith.constant 0 : i32
    %c0_i32_1 = arith.constant 0 : i32
    return %c0_i32, %c0_i32_0 : i32, i32
  }
  func.func @transform_5(%arg0: i32) -> (i32, i32) {
    %c0_i32 = arith.constant 0 : i32
    %c0_i32_0 = arith.constant 0 : i32
    %c0_i32_1 = arith.constant 0 : i32
    return %c0_i32, %c0_i32_0 : i32, i32
  }
  func.func @transform_6(%arg0: i32) -> (i32, i32) {
    %c0_i32 = arith.constant 0 : i32
    %c0_i32_0 = arith.constant 0 : i32
    %c0_i32_1 = arith.constant 0 : i32
    return %c0_i32, %c0_i32_0 : i32, i32
  }
  func.func @transform_7(%arg0: i32) -> (i32, i32) {
    %c0_i32 = arith.constant 0 : i32
    %c0_i32_0 = arith.constant 0 : i32
    %c0_i32_1 = arith.constant 0 : i32
    return %c0_i32, %c0_i32_0 : i32, i32
  }
  func.func @transform_8(%arg0: i32) -> (i32, i32) {
    %c0_i32 = arith.constant 0 : i32
    %c0_i32_0 = arith.constant 0 : i32
    %c0_i32_1 = arith.constant 0 : i32
    return %c0_i32, %c0_i32_0 : i32, i32
  }
  func.func @transform_9(%arg0: i32) -> (i32, i32) {
    %c0_i32 = arith.constant 0 : i32
    %c0_i32_0 = arith.constant 0 : i32
    return %arg0, %c0_i32 : i32, i32
  }
}

</mosaic_0001>

<llo_original>
// kernel: tpu_custom_call.1
$region0: #{tpu_custom_call.1}
  #allocation0 [shape = 'u32[]', space=smem, size = 0x4, offset = 0x4, fixed_abs, tag = 'smem constant byte address 0x4 - core index']
  #allocation1 [shape = 'u32[72,128]{1,0:T(1,128)}', space=vmem, size = 0x9000, scoped, tag = 'internal scratch']
  %s0 = inlined_call_operand.hbm [shape: bf16[16,32], index: 0, kind: input, shape index: {}]
  %s1 = inlined_call_operand.vmem [shape: bf16[32,64], index: 1, kind: input, shape index: {}]
  %s2 = inlined_call_operand.vmem [shape: f32[1,64], index: 2, kind: input, shape index: {}]
  %s3 = inlined_call_operand.vmem [shape: bf16[64,64], index: 3, kind: input, shape index: {}]
  %s4 = inlined_call_operand.vmem [shape: f32[1,64], index: 4, kind: input, shape index: {}]
  %s5 = inlined_call_operand.vmem [shape: bf16[64,32], index: 5, kind: input, shape index: {}]
  %s6 = inlined_call_operand.vmem [shape: f32[1,32], index: 6, kind: input, shape index: {}]
  %s7 = inlined_call_operand.hbm [shape: bf16[32,128], index: 7, kind: input, shape index: {}]
  %s8 = inlined_call_operand.vmem [shape: f32[1,128], index: 8, kind: input, shape index: {}]
  %s9 = inlined_call_operand.hbm [shape: f32[16,128], index: 9, kind: output, shape index: {}]
  %s10 = sld [smem:[#allocation0]]
  $region54: #{tpu_custom_call.1} parent=0
    _
  %s12 = ssub.s32 1, %s10
  %s13 = scalar_select 0, %s12, %s10
  $region1: #{tpu_custom_call.1} parent=0
    #allocation2 [shape = 'u8[4096]{0}', space=vmem, size = 0x1000, scoped, tag = 'input window, operand 0, single buffered']
    #allocation3 [shape = 's32[1]{0}', space=sflag, size = 0x4, scoped, tag = 'scoped memory for tpu_custom_call.1']
    #allocation4 [shape = 's32[1]{0}', space=sflag, size = 0x4, scoped, tag = 'scoped memory for tpu_custom_call.1']
    #allocation5 [shape = 'u8[8192]{0}', space=vmem, size = 0x2000, scoped, tag = 'input window, operand 7, single buffered']
    #allocation6 [shape = 's32[1]{0}', space=sflag, size = 0x4, scoped, tag = 'scoped memory for tpu_custom_call.1']
    #allocation7 [shape = 'u8[8192]{0}', space=vmem, size = 0x2000, scoped, tag = 'output window, operand 0, single buffered']
    %14 = vsyncpa [#allocation3], 0
    %15 = vsyncpa [#allocation6], 0
    %16 = vsyncpa [#allocation4], 0
    // Predicated region
    $region2: #{tpu_custom_call.1} parent=1 // pred_check
      _
    $region3: #{tpu_custom_call.1} parent=1 // pred_check_branch
      %18 = sbr.rel (0) target = $region5
    $region4: #{tpu_custom_call.1} parent=1 // pred_region
      %20 = vsyncadd [#allocation3], 0
      %s21 = sshll.u32 %s0, 4
      %s22 = int_to_ptr.hbm [resolvable:$true] %s21
      %s23 = sshll.u32 [#allocation2], 4
      %s24 = int_to_ptr.vmem [resolvable:$true] %s23
      %29 = dma.hbm_to_vmem [thread:$0]  %s22, 128, %s24, [#allocation3], 64, 64, 4
    $region5: #{tpu_custom_call.1} parent=1 // pred_fallthru
      _
    // Predicated region
    $region6: #{tpu_custom_call.1} parent=1 // pred_check
      _
    $region7: #{tpu_custom_call.1} parent=1 // pred_check_branch
      %31 = sbr.rel (0) target = $region9
    $region8: #{tpu_custom_call.1} parent=1 // pred_region
      _
    $region9: #{tpu_custom_call.1} parent=1 // pred_fallthru
      _
    // Predicated region
    $region10: #{tpu_custom_call.1} parent=1 // pred_check
      _
    $region11: #{tpu_custom_call.1} parent=1 // pred_check_branch
      %33 = sbr.rel (0) target = $region13
    $region12: #{tpu_custom_call.1} parent=1 // pred_region
      _
    $region13: #{tpu_custom_call.1} parent=1 // pred_fallthru
      _
    // Predicated region
    $region14: #{tpu_custom_call.1} parent=1 // pred_check
      _
    $region15: #{tpu_custom_call.1} parent=1 // pred_check_branch
      %35 = sbr.rel (0) target = $region17
    $region16: #{tpu_custom_call.1} parent=1 // pred_region
      _
    $region17: #{tpu_custom_call.1} parent=1 // pred_fallthru
      _
    // Predicated region
    $region18: #{tpu_custom_call.1} parent=1 // pred_check
      _
    $region19: #{tpu_custom_call.1} parent=1 // pred_check_branch
      %37 = sbr.rel (0) target = $region21
    $region20: #{tpu_custom_call.1} parent=1 // pred_region
      _
    $region21: #{tpu_custom_call.1} parent=1 // pred_fallthru
      _
    // Predicated region
    $region22: #{tpu_custom_call.1} parent=1 // pred_check
      _
    $region23: #{tpu_custom_call.1} parent=1 // pred_check_branch
      %39 = sbr.rel (0) target = $region25
    $region24: #{tpu_custom_call.1} parent=1 // pred_region
      _
    $region25: #{tpu_custom_call.1} parent=1 // pred_fallthru
      _
    // Predicated region
    $region26: #{tpu_custom_call.1} parent=1 // pred_check
      _
    $region27: #{tpu_custom_call.1} parent=1 // pred_check_branch
      %41 = sbr.rel (0) target = $region29
    $region28: #{tpu_custom_call.1} parent=1 // pred_region
      _
    $region29: #{tpu_custom_call.1} parent=1 // pred_fallthru
      _
    // Predicated region
    $region30: #{tpu_custom_call.1} parent=1 // pred_check
      _
    $region31: #{tpu_custom_call.1} parent=1 // pred_check_branch
      %43 = sbr.rel (0) target = $region33
    $region32: #{tpu_custom_call.1} parent=1 // pred_region
      %45 = vsyncadd [#allocation6], 0
      %s46 = sshll.u32 %s7, 4
      %s47 = int_to_ptr.hbm [resolvable:$true] %s46
      %s48 = sshll.u32 [#allocation5], 4
      %s49 = int_to_ptr.vmem [resolvable:$true] %s48
      %54 = dma.hbm_to_vmem [thread:$0]  %s47, 256, %s49, [#allocation6], 64, 64, 4
    $region33: #{tpu_custom_call.1} parent=1 // pred_fallthru
      _
    // Predicated region
    $region34: #{tpu_custom_call.1} parent=1 // pred_check
      _
    $region35: #{tpu_custom_call.1} parent=1 // pred_check_branch
      %56 = sbr.rel (0) target = $region37
    $region36: #{tpu_custom_call.1} parent=1 // pred_region
      _
    $region37: #{tpu_custom_call.1} parent=1 // pred_fallthru
      _
    // Predicated region
    $region38: #{tpu_custom_call.1} parent=1 // pred_check
      _
    $region39: #{tpu_custom_call.1} parent=1 // pred_check_branch
      %58 = sbr.rel (0) target = $region41
    $region40: #{tpu_custom_call.1} parent=1 // pred_region
      %60 = dma.done [#allocation3], 128
    $region41: #{tpu_custom_call.1} parent=1 // pred_fallthru
      _
    // Predicated region
    $region42: #{tpu_custom_call.1} parent=1 // pred_check
      _
    $region43: #{tpu_custom_call.1} parent=1 // pred_check_branch
      %62 = sbr.rel (0) target = $region45
    $region44: #{tpu_custom_call.1} parent=1 // pred_region
      %64 = dma.done [#allocation6], 256
    $region45: #{tpu_custom_call.1} parent=1 // pred_fallthru
      _
    %v66 = vld [vmem:[#allocation2] sm:$0xf]
    %v67 = vld [vmem:[#allocation2 + $0x4] sm:$0xf]
    %v68 = vld [vmem:[%s1] sm:$0xf]
    %v69 = vld [vmem:[%s1 + $0x4] sm:$0xf]
    %v70 = vld [vmem:[%s1 + $0x8] sm:$0xf]
    %v71 = vld [vmem:[%s1 + $0xc] sm:$0xf]
    %v72 = vld [vmem:[%s2] sm:$0x1]
    %v74 = vperm.slane %v72, 0
    %v78 = vunpack.c.l.b16 %v66
    %v79 = vunpack.c.l.b16 %v67
    %v80 = vpack.c.b16 %v79, %v78
    %v85 = vunpack.c.l.b16 %v68
    %v86 = vunpack.c.l.b16 %v69
    %v87 = vunpack.c.l.b16 %v70
    %v88 = vunpack.c.l.b16 %v71
    %v89 = vpack.c.b16 %v86, %v85
    %v90 = vpack.c.b16 %v88, %v87
    %vm93 = vcmask 261120
    %v95 = vsel %vm93, %v80, 0
    %97 = vmatpush.bf16.msra.mxu0 0
    %98 = vmatpush.bf16.msra.mxu0 0
    %99 = vmatpush.bf16.msra.mxu0 0
    %100 = vmatpush.bf16.msra.mxu0 0
    %101 = vmatpush.bf16.msra.mxu0 0
    %102 = vmatpush.bf16.msra.mxu0 0
    %103 = vmatpush.bf16.msra.mxu0 %v90
    %104 = vmatpush.bf16.msra.mxu0 %v89
    %105 = vmatmul.bf16.gmra.mxu0 %v95
    %v106 = vpop.f32.mrf.mxu0
    %v107 = vadd.f32 %v74, %v106
    %v108 = vpop.f32.mrf.mxu0
    %v109 = vadd.f32 %v74, %v108
    %110 = vdwg.mxu0
    %v111 = vmax.f32 %v107, 0.0
    %v112 = vmax.f32 %v109, 0.0
    %v113 = vpack.c.bf16 %v112, %v111
    %v114 = vld [vmem:[%s3] sm:$0xf]
    %v115 = vld [vmem:[%s3 + $0x4] sm:$0xf]
    %v116 = vld [vmem:[%s3 + $0x8] sm:$0xf]
    %v117 = vld [vmem:[%s3 + $0xc] sm:$0xf]
    %v118 = vld [vmem:[%s3 + $0x10] sm:$0xf]
    %v119 = vld [vmem:[%s3 + $0x14] sm:$0xf]
    %v120 = vld [vmem:[%s3 + $0x18] sm:$0xf]
    %v121 = vld [vmem:[%s3 + $0x1c] sm:$0xf]
    %v122 = vld [vmem:[%s4] sm:$0x1]
    %v124 = vperm.slane %v122, 0
    %v134 = vunpack.c.l.b16 %v114
    %v135 = vunpack.c.l.b16 %v115
    %v136 = vunpack.c.l.b16 %v116
    %v137 = vunpack.c.l.b16 %v117
    %v138 = vunpack.c.l.b16 %v118
    %v139 = vunpack.c.l.b16 %v119
    %v140 = vunpack.c.l.b16 %v120
    %v141 = vunpack.c.l.b16 %v121
    %v142 = vpack.c.b16 %v135, %v134
    %v143 = vpack.c.b16 %v137, %v136
    %v144 = vpack.c.b16 %v139, %v138
    %v145 = vpack.c.b16 %v141, %v140
    %vm150 = vcmask 523264
    %v152 = vsel %vm150, %v113, 0
    %154 = vmatpush.bf16.msra.mxu0 0
    %155 = vmatpush.bf16.msra.mxu0 0
    %156 = vmatpush.bf16.msra.mxu0 0
    %157 = vmatpush.bf16.msra.mxu0 0
    %158 = vmatpush.bf16.msra.mxu0 %v145
    %159 = vmatpush.bf16.msra.mxu0 %v144
    %160 = vmatpush.bf16.msra.mxu0 %v143
    %161 = vmatpush.bf16.msra.mxu0 %v142
    %162 = vmatmul.bf16.gmra.mxu0 %v152
    %v163 = vpop.f32.mrf.mxu0
    %v164 = vadd.f32 %v124, %v163
    %v165 = vpop.f32.mrf.mxu0
    %v166 = vadd.f32 %v124, %v165
    %167 = vdwg.mxu0
    %v168 = vmax.f32 %v164, 0.0
    %v169 = vmax.f32 %v166, 0.0
    %v170 = vpack.c.bf16 %v169, %v168
    %v171 = vld [vmem:[%s5] sm:$0xf]
    %v172 = vld [vmem:[%s5 + $0x4] sm:$0xf]
    %v173 = vld [vmem:[%s5 + $0x8] sm:$0xf]
    %v174 = vld [vmem:[%s5 + $0xc] sm:$0xf]
    %v175 = vld [vmem:[%s5 + $0x10] sm:$0xf]
    %v176 = vld [vmem:[%s5 + $0x14] sm:$0xf]
    %v177 = vld [vmem:[%s5 + $0x18] sm:$0xf]
    %v178 = vld [vmem:[%s5 + $0x1c] sm:$0xf]
    %v179 = vld [vmem:[%s6] sm:$0x1]
    %v181 = vperm.slane %v179, 0
    %v191 = vunpack.c.l.b16 %v171
    %v192 = vunpack.c.l.b16 %v172
    %v193 = vunpack.c.l.b16 %v173
    %v194 = vunpack.c.l.b16 %v174
    %v195 = vunpack.c.l.b16 %v175
    %v196 = vunpack.c.l.b16 %v176
    %v197 = vunpack.c.l.b16 %v177
    %v198 = vunpack.c.l.b16 %v178
    %v199 = vpack.c.b16 %v192, %v191
    %v200 = vpack.c.b16 %v194, %v193
    %v201 = vpack.c.b16 %v196, %v195
    %v202 = vpack.c.b16 %v198, %v197
    %v208 = vsel %vm150, %v170, 0
    %210 = vmatpush.bf16.msra.mxu0 0
    %211 = vmatpush.bf16.msra.mxu0 0
    %212 = vmatpush.bf16.msra.mxu0 0
    %213 = vmatpush.bf16.msra.mxu0 0
    %214 = vmatpush.bf16.msra.mxu0 %v202
    %215 = vmatpush.bf16.msra.mxu0 %v201
    %216 = vmatpush.bf16.msra.mxu0 %v200
    %217 = vmatpush.bf16.msra.mxu0 %v199
    %218 = vmatmul.bf16.gmra.mxu0 %v208
    %v219 = vpop.f32.mrf.mxu0
    %v220 = vadd.f32 %v181, %v219
    %v221 = vpop.f32.mrf.mxu0
    %v222 = vadd.f32 %v181, %v221
    %223 = vdwg.mxu0
    %v224 = vmax.f32 %v220, 0.0
    %v225 = vmax.f32 %v222, 0.0
    %v226 = vpack.c.bf16 %v225, %v224
    %v227 = vld [vmem:[#allocation5] sm:$0xf]
    %v228 = vld [vmem:[#allocation5 + $0x4] sm:$0xf]
    %v229 = vld [vmem:[#allocation5 + $0x8] sm:$0xf]
    %v230 = vld [vmem:[#allocation5 + $0xc] sm:$0xf]
    %v231 = vld [vmem:[%s8] sm:$0x1]
    %v233 = vperm.slane %v231, 0
    %v239 = vunpack.c.l.b16 %v227
    %v240 = vunpack.c.l.b16 %v228
    %v241 = vunpack.c.l.b16 %v229
    %v242 = vunpack.c.l.b16 %v230
    %v243 = vpack.c.b16 %v240, %v239
    %v244 = vpack.c.b16 %v242, %v241
    %v248 = vsel %vm93, %v226, 0
    %250 = vmatpush.bf16.msra.mxu0 0
    %251 = vmatpush.bf16.msra.mxu0 0
    %252 = vmatpush.bf16.msra.mxu0 0
    %253 = vmatpush.bf16.msra.mxu0 0
    %254 = vmatpush.bf16.msra.mxu0 0
    %255 = vmatpush.bf16.msra.mxu0 0
    %256 = vmatpush.bf16.msra.mxu0 %v244
    %257 = vmatpush.bf16.msra.mxu0 %v243
    %258 = vmatmul.bf16.gmra.mxu0 %v248
    %v259 = vpop.f32.mrf.mxu0
    %v260 = vadd.f32 %v233, %v259
    %v261 = vpop.f32.mrf.mxu0
    %v262 = vadd.f32 %v233, %v261
    %263 = vdwg.mxu0
    %264 = vst [vmem:[#allocation7] sm:$0xff] %v260
    %265 = vst [vmem:[#allocation7 + $0x8] sm:$0xff] %v262
    // Predicated region
    $region46: #{tpu_custom_call.1} parent=1 // pred_check
      _
    $region47: #{tpu_custom_call.1} parent=1 // pred_check_branch
      %267 = sbr.rel (0) target = $region49
    $region48: #{tpu_custom_call.1} parent=1 // pred_region
      %269 = vsyncadd [#allocation4], 0
      %s270 = sshll.u32 [#allocation7], 4
      %s271 = int_to_ptr.vmem [resolvable:$true] %s270
      %s272 = sshll.u32 %s9, 4
      %s273 = int_to_ptr.hbm [resolvable:$true] %s272
      %278 = dma.vmem_to_hbm [thread:$0]  %s271, 256, %s273, [#allocation4], 128, 128, 8
    $region49: #{tpu_custom_call.1} parent=1 // pred_fallthru
      _
    // Predicated region
    $region50: #{tpu_custom_call.1} parent=1 // pred_check
      _
    $region51: #{tpu_custom_call.1} parent=1 // pred_check_branch
      %280 = sbr.rel (0) target = $region53
    $region52: #{tpu_custom_call.1} parent=1 // pred_region
      %282 = dma.done [#allocation4], 256
    $region53: #{tpu_custom_call.1} parent=1 // pred_fallthru
      _
    %283 = vsyncpa [#allocation3], 1
    %284 = vsyncpa [#allocation6], 1
    %285 = vsyncpa [#allocation4], 1

</llo_original>
